<compile_context>
chip_gen: v5e
topology: v5e:2x2
jax: 0.10.0
libtpu: 0.0.40
codegen_flags: <defaults>
</compile_context>

<pallas_src>
import jax
import jax.numpy as jnp
from jax import lax
from jax.experimental import pallas as pl
from jax.experimental.pallas import tpu as pltpu


def decoder_block_kernel(x_ref, sk_ref, tadd_ref, wup_ref, w1_ref, w2_ref,
                         b12_ref, o_ref):
    f32, bf16 = jnp.float32, jnp.bfloat16
    C_in, L = x_ref.shape[1], x_ref.shape[2]
    C_out = o_ref.shape[1]
    L2 = 2 * L

    # ---- boundary / half masks: built once, reused by both conv layers -----
    lane = lax.broadcasted_iota(jnp.int32, (1, L2), 1)
    fh = lane < L                                       # even-position half
    m_first_half = fh.astype(f32)                       # 1 on even half
    m_second_half = 1.0 - m_first_half                  # 1 on odd half
    m_prev_roll = (fh & (lane > 0)).astype(f32)         # even half, j > 0
    m_next_roll = ((lane >= L) & (lane < L2 - 1)).astype(f32)  # odd half, j < 2L-1

    def conv3_rhs(EO, OE):
        """Stack the 3 taps of a k=3, pad=1 conv on the interleaved signal.

        EO = [even positions || odd positions]  (C, 2L)
        OE = roll(EO, L)    = [odd || even]     (C, 2L)
        Returns (3C, 2L) rows [x[p-1]; x[p]; x[p+1]] in even||odd lane layout.
        """
        prev_tap = pltpu.roll(OE, 1, 1) * m_prev_roll + OE * m_second_half
        next_tap = OE * m_first_half + pltpu.roll(OE, L2 - 1, 1) * m_next_roll
        return jnp.concatenate([prev_tap, EO, next_tap], axis=0)

    dot = lambda a, b: jnp.dot(a, b, preferred_element_type=f32)
    leaky = lambda v: jnp.maximum(v, 0.01 * v)

    # ---- ConvTranspose1d(k=2, s=2): one stacked matmul ----------------------
    # rows [:C_out] -> even positions, rows [C_out:] -> odd positions
    y = dot(wup_ref[...], x_ref[0])                     # (2*C_out, L) f32

    tadd = tadd_ref[0]                                  # (C_in, 1) f32
    t_up, t_sk = tadd[:C_out], tadd[C_out:]             # upconv bias folded in t_up

    eo_up = jnp.concatenate([y[:C_out], y[C_out:]], axis=1) + t_up     # (C_out, 2L)
    eo_sk = sk_ref[0].astype(f32) + t_sk                               # (C_skip, 2L)
    EO = jnp.concatenate([eo_up, eo_sk], axis=0)                       # (C_in, 2L)

    b1 = b12_ref[:, 0:1]
    b2 = b12_ref[:, 1:2]

    # ---- Conv1d #1 + LeakyReLU: one (C_out,3*C_in)@(3*C_in,2L) matmul -------
    A1 = conv3_rhs(EO, pltpu.roll(EO, L, 1)).astype(bf16)
    H1 = leaky(dot(w1_ref[...], A1) + b1)               # (C_out, 2L) f32

    # ---- Conv1d #2 + LeakyReLU: one (C_out,3*C_out)@(3*C_out,2L) matmul -----
    A2 = conv3_rhs(H1, pltpu.roll(H1, L, 1)).astype(bf16)
    OUT = leaky(dot(w2_ref[...], A2) + b2)              # (C_out, 2L) even||odd

    o_ref[0] = OUT.astype(o_ref.dtype)


def decoder_block(x, skip, temb, params):
    (wup, bup, wt1, bt1, wt2, bt2, wc1, bc1, wc2, bc2) = params
    B, C_in, L = x.shape
    C_skip = skip.shape[1]
    C_out = wup.shape[1]
    assert C_in == C_out + C_skip, (
        "DecoderBlock.forward requires in_channels == out_channels + skip_channels")
    assert skip.shape[2] == 2 * L

    f32, bf16 = jnp.float32, jnp.bfloat16

    # ---- hoisted time MLP (batched XLA matmuls; exact f32) ------------------
    h = jnp.maximum(temb @ wt1.T + bt1, 0.0)
    t = h @ wt2.T + bt2                                             # (B, C_in)
    # fold the upconv bias into the up-channel slice of the per-batch add
    tadd = jnp.concatenate(
        [t[:, :C_out] + bup.reshape(1, C_out), t[:, C_out:]],
        axis=1).reshape(B, C_in, 1).astype(f32)                     # (B, C_in, 1)

    # ---- skip: de-interleave into even||odd along lanes (one bf16 array) ----
    skip2 = skip.reshape(B, C_skip, L, 2)
    skip_eo = jnp.concatenate([skip2[..., 0], skip2[..., 1]],
                              axis=-1).astype(bf16)                 # (B, C_skip, 2L)

    # ---- pre-pack weights (stacked taps, bf16) ------------------------------
    xb = x.astype(bf16)
    wup_p = jnp.concatenate([wup[:, :, 0].T, wup[:, :, 1].T],
                            axis=0).astype(bf16)                    # (2*C_out, C_in)
    w1_p = jnp.concatenate([wc1[:, :, 0], wc1[:, :, 1], wc1[:, :, 2]],
                           axis=1).astype(bf16)                     # (C_out, 3*C_in)
    w2_p = jnp.concatenate([wc2[:, :, 0], wc2[:, :, 1], wc2[:, :, 2]],
                           axis=1).astype(bf16)                     # (C_out, 3*C_out)
    b12 = jnp.stack([bc1.reshape(C_out), bc2.reshape(C_out)],
                    axis=1).astype(f32)                             # (C_out, 2)

    args = (xb, skip_eo, tadd, wup_p, w1_p, w2_p, b12)

    def fullspec(a):
        nd = a.ndim
        return pl.BlockSpec(a.shape, lambda b, _nd=nd: (0,) * _nd)

    flops = 2 * B * L * (2 * C_out) * C_in \
        + 2 * B * (2 * L) * C_out * (3 * C_in) \
        + 2 * B * (2 * L) * C_out * (3 * C_out)
    bytes_accessed = (sum(int(a.size) * a.dtype.itemsize for a in args)
                      + B * C_out * 2 * L * x.dtype.itemsize)

    out_eo = pl.pallas_call(
        decoder_block_kernel,
        out_shape=jax.ShapeDtypeStruct((B, C_out, 2 * L), x.dtype),
        grid=(B,),
        in_specs=[
            pl.BlockSpec((1, C_in, L), lambda b: (b, 0, 0)),
            pl.BlockSpec((1, C_skip, 2 * L), lambda b: (b, 0, 0)),
            pl.BlockSpec((1, C_in, 1), lambda b: (b, 0, 0)),
            fullspec(wup_p), fullspec(w1_p), fullspec(w2_p), fullspec(b12),
        ],
        out_specs=pl.BlockSpec((1, C_out, 2 * L), lambda b: (b, 0, 0)),
        compiler_params=pltpu.CompilerParams(
            dimension_semantics=("parallel",)),
        cost_estimate=pl.CostEstimate(flops=int(flops), transcendentals=0,
                                      bytes_accessed=int(bytes_accessed)),
    )(*args)

    # ---- single even||odd -> interleaved reshape (one XLA pass) -------------
    out = out_eo.reshape(B, C_out, 2, L).transpose(0, 1, 3, 2).reshape(B, C_out, 2 * L)
    return out


def init_params(key, in_ch, skip_ch, out_ch, t_dim):
    ks = jax.random.split(key, 10)

    def u(k, shape, fan_in):
        bound = 1.0 / (fan_in ** 0.5)
        return jax.random.uniform(k, shape, jnp.float32, -bound, bound)

    wup = u(ks[0], (in_ch, out_ch, 2), in_ch * 2)          # ConvTranspose1d (C_in, C_out, K)
    bup = u(ks[1], (1, out_ch), in_ch * 2)
    wt1 = u(ks[2], (in_ch, t_dim), t_dim)                  # Linear(t_dim -> in_ch)
    bt1 = u(ks[3], (1, in_ch), t_dim)
    wt2 = u(ks[4], (in_ch, in_ch), in_ch)                  # Linear(in_ch -> in_ch)
    bt2 = u(ks[5], (1, in_ch), in_ch)
    wc1 = u(ks[6], (out_ch, out_ch + skip_ch, 3), (out_ch + skip_ch) * 3)
    bc1 = u(ks[7], (1, out_ch), (out_ch + skip_ch) * 3)
    wc2 = u(ks[8], (out_ch, out_ch, 3), out_ch * 3)
    bc2 = u(ks[9], (1, out_ch), out_ch * 3)
    return (wup, bup, wt1, bt1, wt2, bt2, wc1, bc1, wc2, bc2)


def reference(x, skip, temb, params):
    """Pure-JAX f32 replica of the PyTorch forward (for verification)."""
    (wup, bup, wt1, bt1, wt2, bt2, wc1, bc1, wc2, bc2) = params
    B, C_in, L = x.shape
    C_out = wup.shape[1]
    h = jnp.maximum(temb @ wt1.T + bt1, 0.0)
    t = h @ wt2.T + bt2                                    # (B, C_in)
    y = jnp.einsum('bil,iok->bolk', x, wup)                # (B, C_out, L, 2)
    up = y.reshape(B, C_out, 2 * L) + bup.reshape(1, -1, 1)
    xc = jnp.concatenate([up, skip], axis=1) + t[:, :, None]

    def conv(xin, w, b):
        xpad = jnp.pad(xin, ((0, 0), (0, 0), (1, 1)))
        Lo = xin.shape[2]
        out = sum(jnp.einsum('oc,bcl->bol', w[:, :, k], xpad[:, :, k:k + Lo])
                  for k in range(3))
        return out + b.reshape(1, -1, 1)

    h1 = conv(xc, wc1, bc1)
    h1 = jnp.where(h1 > 0, h1, 0.01 * h1)
    h2 = conv(h1, wc2, bc2)
    return jnp.where(h2 > 0, h2, 0.01 * h2)


if __name__ == "__main__":
    # in_channels must equal out_channels + skip_channels.
    B, C_out, C_skip, T, L = 2, 8, 8, 32, 64
    C_in = C_out + C_skip

    key = jax.random.PRNGKey(0)
    kx, ksk, kt, kp = jax.random.split(key, 4)
    x = jax.random.normal(kx, (B, C_in, L), jnp.float32)
    skip = jax.random.normal(ksk, (B, C_skip, 2 * L), jnp.float32)
    temb = jax.random.normal(kt, (B, T), jnp.float32)
    params = init_params(kp, C_in, C_skip, C_out, T)

    out = jax.jit(decoder_block)(x, skip, temb, params)
    out = jax.block_until_ready(out)

    ref = reference(x, skip, temb, params)
    assert out.shape == (B, C_out, 2 * L), out.shape
    # bf16 matmul operands with f32 accumulation -> loosened tolerance vs f32 ref.
    err = float(jnp.max(jnp.abs(out - ref)))
    assert jnp.allclose(out, ref, atol=8e-2, rtol=8e-2), err
    print("KERNEL_OK")
</pallas_src>

<mosaic_0001>
module attributes {stable_mosaic.version = 11 : i64} {
  func.func @decoder_block_kernel(%arg0: i32, %arg1: memref<1x16x64xbf16, #tpu.memory_space<vmem>>, %arg2: memref<1x8x128xbf16, #tpu.memory_space<vmem>>, %arg3: memref<1x16x1xf32, #tpu.memory_space<vmem>>, %arg4: memref<16x16xbf16, #tpu.memory_space<vmem>>, %arg5: memref<8x48xbf16, #tpu.memory_space<vmem>>, %arg6: memref<8x24xbf16, #tpu.memory_space<vmem>>, %arg7: memref<8x2xf32, #tpu.memory_space<vmem>>, %arg8: memref<1x8x128xf32, #tpu.memory_space<vmem>>) attributes {dimension_semantics = [#tpu.dimension_semantics<parallel>], iteration_bounds = array<i64: 2>, scalar_prefetch = 0 : i64, scratch_operands = 0 : i64, tpu.core_type = #tpu.core_type<tc>, window_params = [{transform_indices = @transform_0, window_bounds = array<i64: 1, 16, 64>}, {transform_indices = @transform_1, window_bounds = array<i64: 1, 8, 128>}, {transform_indices = @transform_2, window_bounds = array<i64: 1, 16, 1>}, {pipeline_mode = #tpu.pipeline_mode<synchronous>, transform_indices = @transform_3, window_bounds = array<i64: 16, 16>}, {pipeline_mode = #tpu.pipeline_mode<synchronous>, transform_indices = @transform_4, window_bounds = array<i64: 8, 48>}, {pipeline_mode = #tpu.pipeline_mode<synchronous>, transform_indices = @transform_5, window_bounds = array<i64: 8, 24>}, {pipeline_mode = #tpu.pipeline_mode<synchronous>, transform_indices = @transform_6, window_bounds = array<i64: 8, 2>}, {transform_indices = @transform_7, window_bounds = array<i64: 1, 8, 128>}]} {
    %0 = tpu.iota {dimensions = array<i32: 1>} : vector<1x128xi32>
    %c64_i32 = arith.constant 64 : i32
    %1 = vector.broadcast %c64_i32 : i32 to vector<1x128xi32>
    %2 = arith.cmpi slt, %0, %1 : vector<1x128xi32>
    %3 = arith.extui %2 : vector<1x128xi1> to vector<1x128xi32>
    %4 = arith.sitofp %3 : vector<1x128xi32> to vector<1x128xf32>
    %cst = arith.constant 1.000000e+00 : f32
    %5 = vector.broadcast %cst : f32 to vector<1x128xf32>
    %6 = arith.subf %5, %4 : vector<1x128xf32>
    %c0_i32 = arith.constant 0 : i32
    %7 = vector.broadcast %c0_i32 : i32 to vector<1x128xi32>
    %8 = arith.cmpi sgt, %0, %7 : vector<1x128xi32>
    %9 = arith.andi %2, %8 : vector<1x128xi1>
    %10 = arith.extui %9 : vector<1x128xi1> to vector<1x128xi32>
    %11 = arith.sitofp %10 : vector<1x128xi32> to vector<1x128xf32>
    %c64_i32_0 = arith.constant 64 : i32
    %12 = vector.broadcast %c64_i32_0 : i32 to vector<1x128xi32>
    %13 = arith.cmpi sge, %0, %12 : vector<1x128xi32>
    %c127_i32 = arith.constant 127 : i32
    %14 = vector.broadcast %c127_i32 : i32 to vector<1x128xi32>
    %15 = arith.cmpi slt, %0, %14 : vector<1x128xi32>
    %16 = arith.andi %13, %15 : vector<1x128xi1>
    %17 = arith.extui %16 : vector<1x128xi1> to vector<1x128xi32>
    %18 = arith.sitofp %17 : vector<1x128xi32> to vector<1x128xf32>
    %c0 = arith.constant 0 : index
    %c0_1 = arith.constant 0 : index
    %19 = vector.load %arg4[%c0, %c0_1] : memref<16x16xbf16, #tpu.memory_space<vmem>>, vector<16x16xbf16>
    %c0_2 = arith.constant 0 : index
    %c0_3 = arith.constant 0 : index
    %c0_4 = arith.constant 0 : index
    %20 = vector.load %arg1[%c0_2, %c0_3, %c0_4] : memref<1x16x64xbf16, #tpu.memory_space<vmem>>, vector<1x16x64xbf16>
    %21 = vector.shape_cast %20 : vector<1x16x64xbf16> to vector<16x64xbf16>
    %cst_5 = arith.constant dense<0.000000e+00> : vector<16x64xf32>
    %22 = tpu.matmul %19, %21, %cst_5 {dimension_numbers = #tpu.dot_dimension_numbers<[1], [0], [0], [1], [0, 0, 1, 1], [], []>} : vector<16x16xbf16>, vector<16x64xbf16>, vector<16x64xf32> -> vector<16x64xf32>
    %c0_6 = arith.constant 0 : index
    %c0_7 = arith.constant 0 : index
    %c0_8 = arith.constant 0 : index
    %23 = vector.load %arg3[%c0_6, %c0_7, %c0_8] : memref<1x16x1xf32, #tpu.memory_space<vmem>>, vector<1x16x1xf32>
    %24 = vector.shape_cast %23 : vector<1x16x1xf32> to vector<16x1xf32>
    %25 = vector.extract_strided_slice %24 {offsets = [0, 0], sizes = [8, 1], strides = [1, 1]} : vector<16x1xf32> to vector<8x1xf32>
    %26 = vector.extract_strided_slice %24 {offsets = [8, 0], sizes = [8, 1], strides = [1, 1]} : vector<16x1xf32> to vector<8x1xf32>
    %27 = vector.extract_strided_slice %22 {offsets = [0, 0], sizes = [8, 64], strides = [1, 1]} : vector<16x64xf32> to vector<8x64xf32>
    %28 = vector.extract_strided_slice %22 {offsets = [8, 0], sizes = [8, 64], strides = [1, 1]} : vector<16x64xf32> to vector<8x64xf32>
    %29 = tpu.concatenate %27, %28 in 1 : vector<8x64xf32>, vector<8x64xf32> -> vector<8x128xf32>
    %30 = vector.broadcast %25 : vector<8x1xf32> to vector<8x128xf32>
    %31 = arith.addf %29, %30 : vector<8x128xf32>
    %c0_9 = arith.constant 0 : index
    %c0_10 = arith.constant 0 : index
    %c0_11 = arith.constant 0 : index
    %32 = vector.load %arg2[%c0_9, %c0_10, %c0_11] : memref<1x8x128xbf16, #tpu.memory_space<vmem>>, vector<1x8x128xbf16>
    %33 = vector.shape_cast %32 : vector<1x8x128xbf16> to vector<8x128xbf16>
    %34 = arith.extf %33 : vector<8x128xbf16> to vector<8x128xf32>
    %35 = vector.broadcast %26 : vector<8x1xf32> to vector<8x128xf32>
    %36 = arith.addf %34, %35 : vector<8x128xf32>
    %37 = tpu.concatenate %31, %36 in 0 : vector<8x128xf32>, vector<8x128xf32> -> vector<16x128xf32>
    %c0_12 = arith.constant 0 : index
    %c0_13 = arith.constant 0 : index
    %38 = vector.load %arg7[%c0_12, %c0_13] : memref<8x2xf32, #tpu.memory_space<vmem>>, vector<8x1xf32>
    %c0_14 = arith.constant 0 : index
    %c1 = arith.constant 1 : index
    %39 = vector.load %arg7[%c0_14, %c1] : memref<8x2xf32, #tpu.memory_space<vmem>>, vector<8x1xf32>
    %c64_i32_15 = arith.constant 64 : i32
    %40 = tpu.dynamic_rotate %37 by %c64_i32_15 dim 1 : vector<16x128xf32>, i32 -> vector<16x128xf32>
    %c1_i32 = arith.constant 1 : i32
    %41 = tpu.dynamic_rotate %40 by %c1_i32 dim 1 : vector<16x128xf32>, i32 -> vector<16x128xf32>
    %42 = vector.broadcast %11 : vector<1x128xf32> to vector<16x128xf32>
    %43 = arith.mulf %41, %42 : vector<16x128xf32>
    %44 = vector.broadcast %6 : vector<1x128xf32> to vector<16x128xf32>
    %45 = arith.mulf %40, %44 : vector<16x128xf32>
    %46 = arith.addf %43, %45 : vector<16x128xf32>
    %47 = vector.broadcast %4 : vector<1x128xf32> to vector<16x128xf32>
    %48 = arith.mulf %40, %47 : vector<16x128xf32>
    %c127_i32_16 = arith.constant 127 : i32
    %49 = tpu.dynamic_rotate %40 by %c127_i32_16 dim 1 : vector<16x128xf32>, i32 -> vector<16x128xf32>
    %50 = vector.broadcast %18 : vector<1x128xf32> to vector<16x128xf32>
    %51 = arith.mulf %49, %50 : vector<16x128xf32>
    %52 = arith.addf %48, %51 : vector<16x128xf32>
    %53 = tpu.concatenate %46, %37, %52 in 0 : vector<16x128xf32>, vector<16x128xf32>, vector<16x128xf32> -> vector<48x128xf32>
    %54 = arith.truncf %53 : vector<48x128xf32> to vector<48x128xbf16>
    %c0_17 = arith.constant 0 : index
    %c0_18 = arith.constant 0 : index
    %55 = vector.load %arg5[%c0_17, %c0_18] : memref<8x48xbf16, #tpu.memory_space<vmem>>, vector<8x48xbf16>
    %cst_19 = arith.constant dense<0.000000e+00> : vector<8x128xf32>
    %56 = tpu.matmul %55, %54, %cst_19 {dimension_numbers = #tpu.dot_dimension_numbers<[1], [0], [0], [1], [0, 0, 1, 1], [], []>} : vector<8x48xbf16>, vector<48x128xbf16>, vector<8x128xf32> -> vector<8x128xf32>
    %57 = vector.broadcast %38 : vector<8x1xf32> to vector<8x128xf32>
    %58 = arith.addf %56, %57 : vector<8x128xf32>
    %cst_20 = arith.constant 0.00999999977 : f32
    %59 = vector.broadcast %cst_20 : f32 to vector<8x128xf32>
    %60 = arith.mulf %59, %58 : vector<8x128xf32>
    %61 = arith.maximumf %58, %60 : vector<8x128xf32>
    %c64_i32_21 = arith.constant 64 : i32
    %62 = tpu.dynamic_rotate %61 by %c64_i32_21 dim 1 : vector<8x128xf32>, i32 -> vector<8x128xf32>
    %c1_i32_22 = arith.constant 1 : i32
    %63 = tpu.dynamic_rotate %62 by %c1_i32_22 dim 1 : vector<8x128xf32>, i32 -> vector<8x128xf32>
    %64 = vector.broadcast %11 : vector<1x128xf32> to vector<8x128xf32>
    %65 = arith.mulf %63, %64 : vector<8x128xf32>
    %66 = vector.broadcast %6 : vector<1x128xf32> to vector<8x128xf32>
    %67 = arith.mulf %62, %66 : vector<8x128xf32>
    %68 = arith.addf %65, %67 : vector<8x128xf32>
    %69 = vector.broadcast %4 : vector<1x128xf32> to vector<8x128xf32>
    %70 = arith.mulf %62, %69 : vector<8x128xf32>
    %c127_i32_23 = arith.constant 127 : i32
    %71 = tpu.dynamic_rotate %62 by %c127_i32_23 dim 1 : vector<8x128xf32>, i32 -> vector<8x128xf32>
    %72 = vector.broadcast %18 : vector<1x128xf32> to vector<8x128xf32>
    %73 = arith.mulf %71, %72 : vector<8x128xf32>
    %74 = arith.addf %70, %73 : vector<8x128xf32>
    %75 = tpu.concatenate %68, %61, %74 in 0 : vector<8x128xf32>, vector<8x128xf32>, vector<8x128xf32> -> vector<24x128xf32>
    %76 = arith.truncf %75 : vector<24x128xf32> to vector<24x128xbf16>
    %c0_24 = arith.constant 0 : index
    %c0_25 = arith.constant 0 : index
    %77 = vector.load %arg6[%c0_24, %c0_25] : memref<8x24xbf16, #tpu.memory_space<vmem>>, vector<8x24xbf16>
    %cst_26 = arith.constant dense<0.000000e+00> : vector<8x128xf32>
    %78 = tpu.matmul %77, %76, %cst_26 {dimension_numbers = #tpu.dot_dimension_numbers<[1], [0], [0], [1], [0, 0, 1, 1], [], []>} : vector<8x24xbf16>, vector<24x128xbf16>, vector<8x128xf32> -> vector<8x128xf32>
    %79 = vector.broadcast %39 : vector<8x1xf32> to vector<8x128xf32>
    %80 = arith.addf %78, %79 : vector<8x128xf32>
    %cst_27 = arith.constant 0.00999999977 : f32
    %81 = vector.broadcast %cst_27 : f32 to vector<8x128xf32>
    %82 = arith.mulf %81, %80 : vector<8x128xf32>
    %83 = arith.maximumf %80, %82 : vector<8x128xf32>
    %c0_28 = arith.constant 0 : index
    %c0_29 = arith.constant 0 : index
    %c0_30 = arith.constant 0 : index
    %84 = vector.load %arg8[%c0_28, %c0_29, %c0_30] : memref<1x8x128xf32, #tpu.memory_space<vmem>>, vector<1x8x128xf32>
    %85 = vector.shape_cast %84 : vector<1x8x128xf32> to vector<8x128xf32>
    %86 = vector.shape_cast %83 : vector<8x128xf32> to vector<1x8x128xf32>
    tpu.vector_store %arg8[%c0_28, %c0_29, %c0_30], %86 {strides = array<i32>} : memref<1x8x128xf32, #tpu.memory_space<vmem>>, vector<1x8x128xf32>,
    return
  }
  func.func @transform_0(%arg0: i32) -> (i32, i32, i32) {
    %c0_i32 = arith.constant 0 : i32
    %c0_i32_0 = arith.constant 0 : i32
    %c0_i32_1 = arith.constant 0 : i32
    return %arg0, %c0_i32, %c0_i32_0 : i32, i32, i32
  }
  func.func @transform_1(%arg0: i32) -> (i32, i32, i32) {
    %c0_i32 = arith.constant 0 : i32
    %c0_i32_0 = arith.constant 0 : i32
    %c0_i32_1 = arith.constant 0 : i32
    return %arg0, %c0_i32, %c0_i32_0 : i32, i32, i32
  }
  func.func @transform_2(%arg0: i32) -> (i32, i32, i32) {
    %c0_i32 = arith.constant 0 : i32
    %c0_i32_0 = arith.constant 0 : i32
    %c0_i32_1 = arith.constant 0 : i32
    return %arg0, %c0_i32, %c0_i32_0 : i32, i32, i32
  }
  func.func @transform_3(%arg0: i32) -> (i32, i32) {
    %c0_i32 = arith.constant 0 : i32
    %c0_i32_0 = arith.constant 0 : i32
    %c0_i32_1 = arith.constant 0 : i32
    return %c0_i32, %c0_i32_0 : i32, i32
  }
  func.func @transform_4(%arg0: i32) -> (i32, i32) {
    %c0_i32 = arith.constant 0 : i32
    %c0_i32_0 = arith.constant 0 : i32
    %c0_i32_1 = arith.constant 0 : i32
    return %c0_i32, %c0_i32_0 : i32, i32
  }
  func.func @transform_5(%arg0: i32) -> (i32, i32) {
    %c0_i32 = arith.constant 0 : i32
    %c0_i32_0 = arith.constant 0 : i32
    %c0_i32_1 = arith.constant 0 : i32
    return %c0_i32, %c0_i32_0 : i32, i32
  }
  func.func @transform_6(%arg0: i32) -> (i32, i32) {
    %c0_i32 = arith.constant 0 : i32
    %c0_i32_0 = arith.constant 0 : i32
    %c0_i32_1 = arith.constant 0 : i32
    return %c0_i32, %c0_i32_0 : i32, i32
  }
  func.func @transform_7(%arg0: i32) -> (i32, i32, i32) {
    %c0_i32 = arith.constant 0 : i32
    %c0_i32_0 = arith.constant 0 : i32
    %c0_i32_1 = arith.constant 0 : i32
    return %arg0, %c0_i32, %c0_i32_0 : i32, i32, i32
  }
}

</mosaic_0001>

<llo_original>
// kernel: decoder_block.1
$region0: #{decoder_block.1}
  #allocation0 [shape = 'u32[]', space=smem, size = 0x4, offset = 0x4, fixed_abs, tag = 'smem constant byte address 0x4 - core index']
  #allocation1 [shape = 'u32[72,128]{1,0:T(1,128)}', space=vmem, size = 0x9000, scoped, tag = 'internal scratch']
  %s0 = inlined_call_operand.vmem [shape: bf16[2,16,64], index: 0, kind: input, shape index: {}]
  %s1 = inlined_call_operand.vmem [shape: bf16[2,8,128], index: 1, kind: input, shape index: {}]
  %s2 = inlined_call_operand.vmem [shape: f32[2,16,1], index: 2, kind: input, shape index: {}]
  %s3 = inlined_call_operand.vmem [shape: bf16[16,16], index: 3, kind: input, shape index: {}]
  %s4 = inlined_call_operand.vmem [shape: bf16[8,48], index: 4, kind: input, shape index: {}]
  %s5 = inlined_call_operand.vmem [shape: bf16[8,24], index: 5, kind: input, shape index: {}]
  %s6 = inlined_call_operand.vmem [shape: f32[8,2], index: 6, kind: input, shape index: {}]
  %s7 = inlined_call_operand.vmem [shape: f32[2,8,128], index: 7, kind: output, shape index: {}]
  %s8 = sld [smem:[#allocation0]]
  $region61: #{decoder_block.1} parent=0
    _
  %s10 = ssub.s32 1, %s8
  %s11 = scalar_select 0, %s10, %s8
  loop: start=0, step=1, limit=4
  $region2: #{decoder_block.1} parent=0 // loop_pre_header
    _
  $region3: #{decoder_block.1} parent=0 // loop_header
    %s13 = sphi 0, %s17
    %p14 = scmp.ge.s32.totalorder %s13, 4
    %s23 = sphi 0, %s25
    %s26 = sphi 0, %s23
    %s27 = sphi 0, %s26
    %s43 = sphi 0, %s27
    %s49 = sphi 0, %s51
    %s52 = sphi 0, %s49
    %s53 = sphi 0, %s52
    %s69 = sphi 0, %s53
    %s75 = sphi 0, %s77
    %s78 = sphi 0, %s75
    %s79 = sphi 0, %s78
    %s95 = sphi 0, %s79
    %s99 = sphi 0, %s99
    %s101 = sphi 0, %s99
    %s102 = sphi 0, %s101
    %s116 = sphi 0, %s102
    %s120 = sphi 0, %s120
    %s122 = sphi 0, %s120
    %s123 = sphi 0, %s122
    %s137 = sphi 0, %s123
    %s141 = sphi 0, %s141
    %s143 = sphi 0, %s141
    %s144 = sphi 0, %s143
    %s158 = sphi 0, %s144
    %s162 = sphi 0, %s162
    %s164 = sphi 0, %s162
    %s165 = sphi 0, %s164
    %s179 = sphi 0, %s165
    %s185 = sphi 0, %s187
    %s188 = sphi 0, %s185
    %s189 = sphi 0, %s188
    %s205 = sphi 0, %s189
  $region4: #{decoder_block.1} parent=0 // loop_header_branch
    %16 = sbr.rel (%p14) target = $region8
  $region5: #{decoder_block.1} parent=0 // loop_body
    %s18 = ssub.s32 %s13, 1
    %s19 = ssub.s32 %s13, 2
    %s20 = sadd.s32 %s13, 1
    %s21 = ssub.s32 %s13, %s20
    %p22 = scmp.eq.s32.totalorder %s21, 0
    %s24 = sadd.s32 %s23, 1
    %s25 = scalar_select %p22, %s23, %s24
    %p28 = pneg %p22
    %p29 = scmp.eq.s32.totalorder %s13, 1
    %p30 = por %p28, %p29
    %p31 = scmp.ne.s32.totalorder %s23, %s26
    %p32 = scmp.eq.s32.totalorder %s13, 0
    %p33 = por %p31, %p32
    %p34 = scmp.ne.s32.totalorder %s23, %s26
    %p35 = scmp.eq.s32.totalorder %s18, 1
    %p36 = por %p34, %p35
    %p37 = scmp.ne.s32.totalorder %s26, %s27
    %p38 = scmp.eq.s32.totalorder %s18, 0
    %p39 = por %p37, %p38
    %p40 = scmp.ne.s32.totalorder %s26, %s27
    %p41 = scmp.eq.s32.totalorder %s19, 1
    %p42 = por %p40, %p41
    %p44 = scmp.ne.s32.totalorder %s27, %s43
    %p45 = scmp.eq.s32.totalorder %s19, 0
    %p46 = por %p44, %p45
    %s47 = ssub.s32 %s13, %s20
    %p48 = scmp.eq.s32.totalorder %s47, 0
    %s50 = sadd.s32 %s49, 1
    %s51 = scalar_select %p48, %s49, %s50
    %p54 = pneg %p48
    %p55 = scmp.eq.s32.totalorder %s13, 1
    %p56 = por %p54, %p55
    %p57 = scmp.ne.s32.totalorder %s49, %s52
    %p58 = scmp.eq.s32.totalorder %s13, 0
    %p59 = por %p57, %p58
    %p60 = scmp.ne.s32.totalorder %s49, %s52
    %p61 = scmp.eq.s32.totalorder %s18, 1
    %p62 = por %p60, %p61
    %p63 = scmp.ne.s32.totalorder %s52, %s53
    %p64 = scmp.eq.s32.totalorder %s18, 0
    %p65 = por %p63, %p64
    %p66 = scmp.ne.s32.totalorder %s52, %s53
    %p67 = scmp.eq.s32.totalorder %s19, 1
    %p68 = por %p66, %p67
    %p70 = scmp.ne.s32.totalorder %s53, %s69
    %p71 = scmp.eq.s32.totalorder %s19, 0
    %p72 = por %p70, %p71
    %s73 = ssub.s32 %s13, %s20
    %p74 = scmp.eq.s32.totalorder %s73, 0
    %s76 = sadd.s32 %s75, 1
    %s77 = scalar_select %p74, %s75, %s76
    %p80 = pneg %p74
    %p81 = scmp.eq.s32.totalorder %s13, 1
    %p82 = por %p80, %p81
    %p83 = scmp.ne.s32.totalorder %s75, %s78
    %p84 = scmp.eq.s32.totalorder %s13, 0
    %p85 = por %p83, %p84
    %p86 = scmp.ne.s32.totalorder %s75, %s78
    %p87 = scmp.eq.s32.totalorder %s18, 1
    %p88 = por %p86, %p87
    %p89 = scmp.ne.s32.totalorder %s78, %s79
    %p90 = scmp.eq.s32.totalorder %s18, 0
    %p91 = por %p89, %p90
    %p92 = scmp.ne.s32.totalorder %s78, %s79
    %p93 = scmp.eq.s32.totalorder %s19, 1
    %p94 = por %p92, %p93
    %p96 = scmp.ne.s32.totalorder %s79, %s95
    %p97 = scmp.eq.s32.totalorder %s19, 0
    %p98 = por %p96, %p97
    %s100 = sadd.s32 %s99, 1
    %p103 = scmp.eq.s32.totalorder %s13, 1
    %p104 = scmp.ne.s32.totalorder %s99, %s101
    %p105 = scmp.eq.s32.totalorder %s13, 0
    %p106 = por %p104, %p105
    %p107 = scmp.ne.s32.totalorder %s99, %s101
    %p108 = scmp.eq.s32.totalorder %s18, 1
    %p109 = por %p107, %p108
    %p110 = scmp.ne.s32.totalorder %s101, %s102
    %p111 = scmp.eq.s32.totalorder %s18, 0
    %p112 = por %p110, %p111
    %p113 = scmp.ne.s32.totalorder %s101, %s102
    %p114 = scmp.eq.s32.totalorder %s19, 1
    %p115 = por %p113, %p114
    %p117 = scmp.ne.s32.totalorder %s102, %s116
    %p118 = scmp.eq.s32.totalorder %s19, 0
    %p119 = por %p117, %p118
    %s121 = sadd.s32 %s120, 1
    %p124 = scmp.eq.s32.totalorder %s13, 1
    %p125 = scmp.ne.s32.totalorder %s120, %s122
    %p126 = scmp.eq.s32.totalorder %s13, 0
    %p127 = por %p125, %p126
    %p128 = scmp.ne.s32.totalorder %s120, %s122
    %p129 = scmp.eq.s32.totalorder %s18, 1
    %p130 = por %p128, %p129
    %p131 = scmp.ne.s32.totalorder %s122, %s123
    %p132 = scmp.eq.s32.totalorder %s18, 0
    %p133 = por %p131, %p132
    %p134 = scmp.ne.s32.totalorder %s122, %s123
    %p135 = scmp.eq.s32.totalorder %s19, 1
    %p136 = por %p134, %p135
    %p138 = scmp.ne.s32.totalorder %s123, %s137
    %p139 = scmp.eq.s32.totalorder %s19, 0
    %p140 = por %p138, %p139
    %s142 = sadd.s32 %s141, 1
    %p145 = scmp.eq.s32.totalorder %s13, 1
    %p146 = scmp.ne.s32.totalorder %s141, %s143
    %p147 = scmp.eq.s32.totalorder %s13, 0
    %p148 = por %p146, %p147
    %p149 = scmp.ne.s32.totalorder %s141, %s143
    %p150 = scmp.eq.s32.totalorder %s18, 1
    %p151 = por %p149, %p150
    %p152 = scmp.ne.s32.totalorder %s143, %s144
    %p153 = scmp.eq.s32.totalorder %s18, 0
    %p154 = por %p152, %p153
    %p155 = scmp.ne.s32.totalorder %s143, %s144
    %p156 = scmp.eq.s32.totalorder %s19, 1
    %p157 = por %p155, %p156
    %p159 = scmp.ne.s32.totalorder %s144, %s158
    %p160 = scmp.eq.s32.totalorder %s19, 0
    %p161 = por %p159, %p160
    %s163 = sadd.s32 %s162, 1
    %p166 = scmp.eq.s32.totalorder %s13, 1
    %p167 = scmp.ne.s32.totalorder %s162, %s164
    %p168 = scmp.eq.s32.totalorder %s13, 0
    %p169 = por %p167, %p168
    %p170 = scmp.ne.s32.totalorder %s162, %s164
    %p171 = scmp.eq.s32.totalorder %s18, 1
    %p172 = por %p170, %p171
    %p173 = scmp.ne.s32.totalorder %s164, %s165
    %p174 = scmp.eq.s32.totalorder %s18, 0
    %p175 = por %p173, %p174
    %p176 = scmp.ne.s32.totalorder %s164, %s165
    %p177 = scmp.eq.s32.totalorder %s19, 1
    %p178 = por %p176, %p177
    %p180 = scmp.ne.s32.totalorder %s165, %s179
    %p181 = scmp.eq.s32.totalorder %s19, 0
    %p182 = por %p180, %p181
    %s183 = ssub.s32 %s13, %s20
    %p184 = scmp.eq.s32.totalorder %s183, 0
    %s186 = sadd.s32 %s185, 1
    %s187 = scalar_select %p184, %s185, %s186
    %p190 = pneg %p184
    %p191 = scmp.eq.s32.totalorder %s13, 1
    %p192 = por %p190, %p191
    %p193 = scmp.ne.s32.totalorder %s185, %s188
    %p194 = scmp.eq.s32.totalorder %s13, 0
    %p195 = por %p193, %p194
    %p196 = scmp.ne.s32.totalorder %s185, %s188
    %p197 = scmp.eq.s32.totalorder %s18, 1
    %p198 = por %p196, %p197
    %p199 = scmp.ne.s32.totalorder %s188, %s189
    %p200 = scmp.eq.s32.totalorder %s18, 0
    %p201 = por %p199, %p200
    %p202 = scmp.ne.s32.totalorder %s188, %s189
    %p203 = scmp.eq.s32.totalorder %s19, 1
    %p204 = por %p202, %p203
    %p206 = scmp.ne.s32.totalorder %s189, %s205
    %p207 = scmp.eq.s32.totalorder %s19, 0
    %p208 = por %p206, %p207
    %p209 = scmp.le.s32.totalorder 1, %s13
    %p210 = scmp.lt.s32.totalorder %s13, 3
    %p211 = pnand %p209, %p210
    %p212 = pneg %p211
    // Predicated region
    $region9: #{decoder_block.1} parent=5 // pred_check
      _
    $region10: #{decoder_block.1} parent=5 // pred_check_branch
      %214 = sbr.rel (%p211) target = $region12
    $region11: #{decoder_block.1} parent=5 // pred_region
      %s215 = ssub.s32 %s13, 1
      // Predicated region
      $region13: #{decoder_block.1} parent=11 // pred_check
        %p216 = pneg %p112
      $region14: #{decoder_block.1} parent=11 // pred_check_branch
        %218 = sbr.rel (%p216) target = $region16
      $region15: #{decoder_block.1} parent=11 // pred_region
        _
      $region16: #{decoder_block.1} parent=11 // pred_fallthru
        _
      // Predicated region
      $region17: #{decoder_block.1} parent=11 // pred_check
        %p219 = pneg %p133
      $region18: #{decoder_block.1} parent=11 // pred_check_branch
        %221 = sbr.rel (%p219) target = $region20
      $region19: #{decoder_block.1} parent=11 // pred_region
        _
      $region20: #{decoder_block.1} parent=11 // pred_fallthru
        _
      // Predicated region
      $region21: #{decoder_block.1} parent=11 // pred_check
        %p222 = pneg %p154
      $region22: #{decoder_block.1} parent=11 // pred_check_branch
        %224 = sbr.rel (%p222) target = $region24
      $region23: #{decoder_block.1} parent=11 // pred_region
        _
      $region24: #{decoder_block.1} parent=11 // pred_fallthru
        _
      // Predicated region
      $region25: #{decoder_block.1} parent=11 // pred_check
        %p225 = pneg %p175
      $region26: #{decoder_block.1} parent=11 // pred_check_branch
        %227 = sbr.rel (%p225) target = $region28
      $region27: #{decoder_block.1} parent=11 // pred_region
        _
      $region28: #{decoder_block.1} parent=11 // pred_fallthru
        _
    $region12: #{decoder_block.1} parent=5 // pred_fallthru
      _
    %p228 = scmp.lt.s32.totalorder %s13, 2
    // Predicated region
    $region29: #{decoder_block.1} parent=5 // pred_check
      %p229 = pneg %p228
    $region30: #{decoder_block.1} parent=5 // pred_check_branch
      %231 = sbr.rel (%p229) target = $region32
    $region31: #{decoder_block.1} parent=5 // pred_region
      // Predicated region
      $region33: #{decoder_block.1} parent=31 // pred_check
        %p232 = pneg %p33
      $region34: #{decoder_block.1} parent=31 // pred_check_branch
        %234 = sbr.rel (%p232) target = $region36
      $region35: #{decoder_block.1} parent=31 // pred_region
        %p235 = scmp.lt.s32.totalorder %s13, 1
        %s236 = scalar_select %p235, %s13, 1
        %s237 = smul.addr %s236, 2
        %s238 = smul.addr %s237, 4
        %s239 = scalar_lea.vmem %s0, %s238
      $region36: #{decoder_block.1} parent=31 // pred_fallthru
        _
      // Predicated region
      $region37: #{decoder_block.1} parent=31 // pred_check
        %p240 = pneg %p59
      $region38: #{decoder_block.1} parent=31 // pred_check_branch
        %242 = sbr.rel (%p240) target = $region40
      $region39: #{decoder_block.1} parent=31 // pred_region
        %p243 = scmp.lt.s32.totalorder %s13, 1
        %s244 = scalar_select %p243, %s13, 1
        %s245 = smul.addr %s244, 4
        %s246 = scalar_lea.vmem %s1, %s245
      $region40: #{decoder_block.1} parent=31 // pred_fallthru
        _
      // Predicated region
      $region41: #{decoder_block.1} parent=31 // pred_check
        %p247 = pneg %p85
      $region42: #{decoder_block.1} parent=31 // pred_check_branch
        %249 = sbr.rel (%p247) target = $region44
      $region43: #{decoder_block.1} parent=31 // pred_region
        %p250 = scmp.lt.s32.totalorder %s13, 1
        %s251 = scalar_select %p250, %s13, 1
        %s252 = smul.addr %s251, 2
        %s253 = smul.addr %s252, 8
        %s254 = scalar_lea.vmem %s2, %s253
      $region44: #{decoder_block.1} parent=31 // pred_fallthru
        _
    $region32: #{decoder_block.1} parent=5 // pred_fallthru
      _
    %p255 = scmp.le.s32.totalorder 1, %s13
    %p256 = scmp.lt.s32.totalorder %s13, 3
    %p257 = pnand %p255, %p256
    %p258 = pneg %p257
    // Predicated region
    $region45: #{decoder_block.1} parent=5 // pred_check
      _
    $region46: #{decoder_block.1} parent=5 // pred_check_branch
      %260 = sbr.rel (%p257) target = $region48
    $region47: #{decoder_block.1} parent=5 // pred_region
      %s261 = ssub.s32 %s13, 1
      %p262 = scmp.lt.s32.totalorder %s18, 1
      %s263 = scalar_select %p262, %s18, 1
      %s264 = smul.addr %s263, 2
      %s265 = smul.addr %s264, 4
      %s266 = scalar_lea.vmem %s0, %s265
      %p267 = pneg %p39
      %p268 = pneg %p36
      %p269 = scmp.lt.s32.totalorder %s18, 1
      %s270 = scalar_select %p269, %s18, 1
      %s271 = smul.addr %s270, 4
      %s272 = scalar_lea.vmem %s1, %s271
      %p273 = pneg %p65
      %p274 = pneg %p62
      %p275 = scmp.lt.s32.totalorder %s18, 1
      %s276 = scalar_select %p275, %s18, 1
      %s277 = smul.addr %s276, 2
      %s278 = smul.addr %s277, 8
      %s279 = scalar_lea.vmem %s2, %s278
      %p280 = pneg %p91
      %p281 = pneg %p88
      %p282 = pneg %p112
      %p283 = pneg %p109
      %p284 = pneg %p133
      %p285 = pneg %p130
      %p286 = pneg %p154
      %p287 = pneg %p151
      %p288 = pneg %p175
      %p289 = pneg %p172
      %p290 = pneg %p201
      %p291 = pneg %p198
      %p292 = scmp.lt.s32.totalorder %s18, 1
      %s293 = scalar_select %p292, %s18, 1
      %s294 = smul.addr %s293, 8
      %s295 = scalar_lea.vmem %s7, %s294
      %p296 = scmp.lt.s32.totalorder %s18, 1
      %s297 = scalar_select %p296, %s18, 1
      %s298 = smul.addr %s297, 2
      %s299 = smul.addr %s298, 4
      %s300 = scalar_lea.vmem %s0, %s299
      %p301 = scmp.lt.s32.totalorder %s18, 1
      %s302 = scalar_select %p301, %s18, 1
      %s303 = smul.addr %s302, 4
      %s304 = scalar_lea.vmem %s1, %s303
      %p305 = scmp.lt.s32.totalorder %s18, 1
      %s306 = scalar_select %p305, %s18, 1
      %s307 = smul.addr %s306, 2
      %s308 = smul.addr %s307, 8
      %s309 = scalar_lea.vmem %s2, %s308
      %p310 = scmp.lt.s32.totalorder %s18, 1
      %s311 = scalar_select %p310, %s18, 1
      %s312 = smul.addr %s311, 8
      %s313 = scalar_lea.vmem %s7, %s312
      %v315 = vlaneseq
      %v316 = vand.u32 %v315, 127
      %vm317 = vcmp.lt.s32.totalorder %v316, 64
      %v318 = vsel %vm317, 1, 0
      %v319 = vcvt.s32.f32 %v318
      %v320 = vsub.f32 1.0, %v319
      %vm321 = vcmp.gt.s32.totalorder %v316, 0
      %vm322 = vmand %vm317, %vm321
      %v323 = vsel %vm322, 1, 0
      %v324 = vcvt.s32.f32 %v323
      %vm325 = vcmp.ge.s32.totalorder %v316, 64
      %vm326 = vcmp.lt.s32.totalorder %v316, 127
      %vm327 = vmand %vm325, %vm326
      %v328 = vsel %vm327, 1, 0
      %v329 = vcvt.s32.f32 %v328
      %v330 = vld [vmem:[%s3] sm:$0xf]
      %v331 = vld [vmem:[%s3 + $0x4] sm:$0xf]
      %v332 = vld [vmem:[%s300] sm:$0xf]
      %v333 = vld [vmem:[%s300 + $0x4] sm:$0xf]
      %v336 = vunpack.c.l.b16 %v330
      %v337 = vunpack.c.l.b16 %v331
      %v338 = vpack.c.b16 %v337, %v336
      %v341 = vunpack.c.l.b16 %v332
      %v342 = vunpack.c.l.b16 %v333
      %v343 = vpack.c.b16 %v342, %v341
      %vm345 = vcmask 130048
      %v347 = vsel %vm345, %v338, 0
      %349 = vmatpush.bf16.msra.mxu0 0
      %350 = vmatpush.bf16.msra.mxu0 0
      %351 = vmatpush.bf16.msra.mxu0 0
      %352 = vmatpush.bf16.msra.mxu0 0
      %353 = vmatpush.bf16.msra.mxu0 0
      %354 = vmatpush.bf16.msra.mxu0 0
      %355 = vmatpush.bf16.msra.mxu0 0
      %356 = vmatpush.bf16.msra.mxu0 %v343
      %357 = vmatmul.bf16.gmra.mxu0 %v347
      %v358 = vpop.f32.mrf.mxu0
      %v359 = vadd.f32 0.0, %v358
      %v360 = vpop.f32.mrf.mxu0
      %v361 = vadd.f32 0.0, %v360
      %362 = vdwg.mxu0
      %v363 = vld [vmem:[%s309] sm:$0xff]
      %v364 = vld [vmem:[%s309 + $0x8] sm:$0xff]
      %366 = vrot.lane.b32.xlu0 %v361, 64
      %v367 = vpop.permute.xlu0 %366
      %vm369 = vcmask 523264
      %v370 = vsel %vm369, %v359, %v367
      %372 = vset.pattern.permute.xlu0 0
      %373 = vperm.xlu0 %372, %v363
      %v374 = vpop.permute.xlu0 %373
      %v376 = vadd.f32 %v370, %v374
      %v377 = vld [vmem:[%s304] sm:$0xf]
      %v378 = vunpack.c.l.bf16 %v377
      %380 = vset.pattern.permute.xlu0 0
      %381 = vperm.xlu0 %380, %v364
      %v382 = vpop.permute.xlu0 %381
      %v384 = vadd.f32 %v378, %v382
      %v385 = vld [vmem:[%s6] sm:$0xff]
      %386 = vrot.lane.b32.xlu0 %v376, 64
      %v387 = vpop.permute.xlu0 %386
      %388 = vrot.lane.b32.xlu0 %v384, 64
      %v389 = vpop.permute.xlu0 %388
      %390 = vrot.lane.b32.xlu0 %v387, 1
      %v391 = vpop.permute.xlu0 %390
      %392 = vrot.lane.b32.xlu0 %v389, 1
      %v393 = vpop.permute.xlu0 %392
      %v394 = vmul.f32 %v391, %v324
      %v395 = vmul.f32 %v393, %v324
      %v396 = vmul.f32 %v387, %v320
      %v397 = vmul.f32 %v389, %v320
      %v398 = vadd.f32 %v394, %v396
      %v399 = vadd.f32 %v395, %v397
      %v400 = vmul.f32 %v387, %v319
      %v401 = vmul.f32 %v389, %v319
      %402 = vrot.lane.b32.xlu0 %v387, 127
      %v403 = vpop.permute.xlu0 %402
      %404 = vrot.lane.b32.xlu0 %v389, 127
      %v405 = vpop.permute.xlu0 %404
      %v406 = vmul.f32 %v403, %v329
      %v407 = vmul.f32 %v405, %v329
      %v408 = vadd.f32 %v400, %v406
      %v409 = vadd.f32 %v401, %v407
      %v410 = vpack.c.bf16 %v399, %v398
      %v411 = vpack.c.bf16 %v384, %v376
      %v412 = vpack.c.bf16 %v409, %v408
      %v413 = vld [vmem:[%s4] sm:$0xf]
      %415 = vset.pattern.permute.xlu0 0
      %416 = vperm.xlu0 %415, %v385
      %v417 = vpop.permute.xlu0 %416
      %vm419 = vcmask 392192
      %v421 = vsel %vm419, %v413, 0
      %423 = vmatpush.bf16.msra.mxu0 0
      %424 = vmatpush.bf16.msra.mxu0 0
      %425 = vmatpush.bf16.msra.mxu0 0
      %426 = vmatpush.bf16.msra.mxu0 0
      %427 = vmatpush.bf16.msra.mxu0 0
      %428 = vmatpush.bf16.msra.mxu0 %v412
      %429 = vmatpush.bf16.msra.mxu0 %v411
      %430 = vmatpush.bf16.msra.mxu0 %v410
      %431 = vmatmul.bf16.gmra.mxu0 %v421
      %v432 = vpop.f32.mrf.mxu0
      %v433 = vadd.f32 %v417, %v432
      %v434 = vpop.f32.mrf.mxu0
      %435 = vdwg.mxu0
      %v436 = vmul.f32 %v433, 0.01
      %v437 = vmax.f32 %v433, %v436
      %438 = vrot.lane.b32.xlu0 %v437, 64
      %v439 = vpop.permute.xlu0 %438
      %440 = vrot.lane.b32.xlu0 %v439, 1
      %v441 = vpop.permute.xlu0 %440
      %v442 = vmul.f32 %v441, %v324
      %v443 = vmul.f32 %v439, %v320
      %v444 = vadd.f32 %v442, %v443
      %v445 = vmul.f32 %v439, %v319
      %446 = vrot.lane.b32.xlu0 %v439, 127
      %v447 = vpop.permute.xlu0 %446
      %v448 = vmul.f32 %v447, %v329
      %v449 = vadd.f32 %v445, %v448
      %v450 = vpack.c.bf16 %v437, %v444
      %v451 = vpack.c.bf16 %v449, %v449
      %v452 = vld [vmem:[%s5] sm:$0xf]
      %453 = vset.pattern.permute.xlu0 1
      %454 = vperm.xlu0 %453, %v385
      %v455 = vpop.permute.xlu0 %454
      %vm457 = vcmask 195584
      %v459 = vsel %vm457, %v452, 0
      %vm461 = vcmask 1043456
      %v463 = vsel %vm461, %v451, 0
      %465 = vmatpush.bf16.msra.mxu0 0
      %466 = vmatpush.bf16.msra.mxu0 0
      %467 = vmatpush.bf16.msra.mxu0 0
      %468 = vmatpush.bf16.msra.mxu0 0
      %469 = vmatpush.bf16.msra.mxu0 0
      %470 = vmatpush.bf16.msra.mxu0 0
      %471 = vmatpush.bf16.msra.mxu0 %v463
      %472 = vmatpush.bf16.msra.mxu0 %v450
      %473 = vmatmul.bf16.gmra.mxu0 %v459
      %v474 = vpop.f32.mrf.mxu0
      %v475 = vadd.f32 %v455, %v474
      %v476 = vpop.f32.mrf.mxu0
      %477 = vdwg.mxu0
      %v478 = vmul.f32 %v475, 0.01
      %v479 = vmax.f32 %v475, %v478
      %480 = vst [vmem:[%s313] sm:$0xff] %v479
      %p481 = scmp.lt.s32.totalorder %s18, 1
      %s482 = scalar_select %p481, %s18, 1
      %s483 = smul.addr %s482, 8
      %s484 = scalar_lea.vmem %s7, %s483
      // Predicated region
      $region49: #{decoder_block.1} parent=47 // pred_check
        %p485 = pneg %p198
      $region50: #{decoder_block.1} parent=47 // pred_check_branch
        %487 = sbr.rel (%p485) target = $region52
      $region51: #{decoder_block.1} parent=47 // pred_region
        _
      $region52: #{decoder_block.1} parent=47 // pred_fallthru
        _
    $region48: #{decoder_block.1} parent=5 // pred_fallthru
      _
    %p488 = scmp.le.s32.totalorder 2, %s13
    // Predicated region
    $region53: #{decoder_block.1} parent=5 // pred_check
      %p489 = pneg %p488
    $region54: #{decoder_block.1} parent=5 // pred_check_branch
      %491 = sbr.rel (%p489) target = $region56
    $region55: #{decoder_block.1} parent=5 // pred_region
      %s492 = ssub.s32 %s13, 2
      // Predicated region
      $region57: #{decoder_block.1} parent=55 // pred_check
        %p493 = pneg %p204
      $region58: #{decoder_block.1} parent=55 // pred_check_branch
        %495 = sbr.rel (%p493) target = $region60
      $region59: #{decoder_block.1} parent=55 // pred_region
        %p496 = scmp.lt.s32.totalorder %s19, 1
        %s497 = scalar_select %p496, %s19, 1
        %s498 = smul.addr %s497, 8
        %s499 = scalar_lea.vmem %s7, %s498
      $region60: #{decoder_block.1} parent=55 // pred_fallthru
        _
    $region56: #{decoder_block.1} parent=5 // pred_fallthru
      _
  $region6: #{decoder_block.1} parent=0 // loop_footer
    %s17 = sadd.s32 1, %s13
  $region7: #{decoder_block.1} parent=0 // loop_footer_branch
    %12 = sbr.rel target = $region3
  $region8: #{decoder_block.1} parent=0 // loop_exit
    _

</llo_original>
